<compile_context>
chip_gen: v5e
topology: v5e:2x2
jax: 0.10.0
libtpu: 0.0.40
codegen_flags: <defaults>
</compile_context>

<pallas_src>
import math

import jax
import jax.numpy as jnp
from jax import lax
from jax.experimental import pallas as pl
from jax.experimental.pallas import tpu as pltpu

_LANES = 128            # vreg lane width; keeps output stores lane-dense
_MAX_BLOCK_ROWS = 2048  # (2048, 128) f32 = 1 MiB per block buffer


def _round_up(x: int, m: int) -> int:
    return (x + m - 1) // m * m


def _mix32(x):
    """lowbias32-style 32-bit avalanche mixer (wrapping int32 arithmetic)."""
    x = x ^ lax.shift_right_logical(x, jnp.int32(16))
    x = x * jnp.int32(0x7FEB352D)
    x = x ^ lax.shift_right_logical(x, jnp.int32(15))
    x = x * jnp.int32(-2073352565)          # 0x846CA68B as signed int32
    x = x ^ lax.shift_right_logical(x, jnp.int32(16))
    return x


def _rand_block_kernel(seed_ref, out_ref):
    """Fill one (block_rows, 128) block with uniform [0, 1) float32 randoms."""
    rows, lanes = out_ref.shape             # static block shape
    blk = pl.program_id(0)

    # Global flat element index of every slot in this block.
    row = lax.broadcasted_iota(jnp.int32, (rows, lanes), 0)
    col = lax.broadcasted_iota(jnp.int32, (rows, lanes), 1)
    gidx = (blk * rows + row) * lanes + col

    # Counter-based PRNG: hash(global_index mixed with seed).  Distinct seeds
    # and distinct grid blocks produce independent streams; results do not
    # depend on the tiling.
    seed_mix = _mix32(seed_ref[0] * jnp.int32(-1640531527)   # 0x9E3779B9
                      + jnp.int32(0x3C6EF372))
    bits = _mix32(gidx ^ seed_mix)

    # Top 23 bits -> mantissa-resolution uniform in [0, 1).
    mant = lax.shift_right_logical(bits, jnp.int32(9))        # in [0, 2^23)
    out_ref[...] = (mant.astype(jnp.float32)
                    * jnp.float32(1.0 / (1 << 23))).astype(out_ref.dtype)


def rand_like_pallas(shape, dtype, seed=0):
    """torch.rand_like equivalent: uniform [0, 1) tensor of `shape`/`dtype`."""
    total = int(math.prod(shape))
    n = max(total, 1)

    # Lane-dense padded layout: (rows, 128) f32, rows a multiple of 8.
    rows = _round_up(pl.cdiv(n, _LANES), 8)
    block_rows = min(_MAX_BLOCK_ROWS, rows)
    rows = _round_up(rows, block_rows)
    grid = rows // block_rows

    seed_arr = jnp.asarray([seed], dtype=jnp.int32)
    padded = pl.pallas_call(
        _rand_block_kernel,
        grid=(grid,),
        out_shape=jax.ShapeDtypeStruct((rows, _LANES), jnp.float32),
        in_specs=[pl.BlockSpec(memory_space=pltpu.MemorySpace.SMEM)],
        out_specs=pl.BlockSpec((block_rows, _LANES), lambda i: (i, 0)),
        compiler_params=pltpu.CompilerParams(
            dimension_semantics=("parallel",)),
    )(seed_arr)

    # Wrapper-side slice/reshape keeps the kernel's stores full-lane
    # (no masked vst, no in-kernel sub-tile relayout).
    flat = padded.reshape(-1)[:total]
    return flat.reshape(shape).astype(dtype)


def model_forward(x1, seed=0):
    # t1 = F.dropout(x1, p=0.5) is dead code: only its shape/dtype feed
    # rand_like, so the dropout path (and the x1 input DMA) is eliminated.
    # Callers must pass a fresh seed per call to mimic torch's advancing
    # global RNG state.
    return rand_like_pallas(x1.shape, x1.dtype, seed=seed)


if __name__ == "__main__":
    key = jax.random.PRNGKey(0)
    # Shape taken from the reference module: x1 = torch.randn(1, 2, 2)
    x1 = jax.random.normal(key, (1, 2, 2), dtype=jnp.float32)

    out = model_forward(x1, seed=0)
    out = jax.block_until_ready(out)
    assert out.shape == x1.shape, out.shape
    assert out.dtype == x1.dtype, out.dtype
    assert bool(jnp.all((out >= 0.0) & (out < 1.0)))

    # Also exercise the tiled multi-block (grid > 1) path on a larger shape.
    big_shape = (3, 512, 256)
    big = rand_like_pallas(big_shape, jnp.float32, seed=123)
    big = jax.block_until_ready(big)
    assert big.shape == big_shape
    assert bool(jnp.all((big >= 0.0) & (big < 1.0)))
    mean = float(jnp.mean(big))
    assert 0.45 < mean < 0.55, mean

    print("KERNEL_OK")
</pallas_src>

<mosaic_0001>
module attributes {stable_mosaic.version = 11 : i64} {
  func.func @_rand_block_kernel(%arg0: i32, %arg1: memref<1xi32, #tpu.memory_space<smem>>, %arg2: memref<8x128xf32, #tpu.memory_space<vmem>>) attributes {dimension_semantics = [#tpu.dimension_semantics<parallel>], iteration_bounds = array<i64: 1>, scalar_prefetch = 0 : i64, scratch_operands = 0 : i64, tpu.core_type = #tpu.core_type<tc>, window_params = [{transform_indices = @transform_0, window_bounds = array<i64: 1>}, {transform_indices = @transform_1, window_bounds = array<i64: 8, 128>}]} {
    %0 = tpu.iota {dimensions = array<i32: 0>} : vector<8x128xi32>
    %1 = tpu.iota {dimensions = array<i32: 1>} : vector<8x128xi32>
    %c8_i32 = arith.constant 8 : i32
    %2 = arith.muli %arg0, %c8_i32 : i32
    %3 = vector.broadcast %2 : i32 to vector<8x128xi32>
    %4 = arith.addi %3, %0 : vector<8x128xi32>
    %c128_i32 = arith.constant 128 : i32
    %5 = vector.broadcast %c128_i32 : i32 to vector<8x128xi32>
    %6 = arith.muli %4, %5 : vector<8x128xi32>
    %7 = arith.addi %6, %1 : vector<8x128xi32>
    %c0 = arith.constant 0 : index
    %8 = memref.load %arg1[%c0] : memref<1xi32, #tpu.memory_space<smem>>
    %c-1640531527_i32 = arith.constant -1640531527 : i32
    %9 = arith.muli %8, %c-1640531527_i32 : i32
    %c1013904242_i32 = arith.constant 1013904242 : i32
    %10 = arith.addi %9, %c1013904242_i32 : i32
    %c16_i32 = arith.constant 16 : i32
    %11 = arith.shrui %10, %c16_i32 : i32
    %12 = arith.xori %10, %11 : i32
    %c2146121005_i32 = arith.constant 2146121005 : i32
    %13 = arith.muli %12, %c2146121005_i32 : i32
    %c15_i32 = arith.constant 15 : i32
    %14 = arith.shrui %13, %c15_i32 : i32
    %15 = arith.xori %13, %14 : i32
    %c-2073352565_i32 = arith.constant -2073352565 : i32
    %16 = arith.muli %15, %c-2073352565_i32 : i32
    %c16_i32_0 = arith.constant 16 : i32
    %17 = arith.shrui %16, %c16_i32_0 : i32
    %18 = arith.xori %16, %17 : i32
    %19 = vector.broadcast %18 : i32 to vector<8x128xi32>
    %20 = arith.xori %7, %19 : vector<8x128xi32>
    %c16_i32_1 = arith.constant 16 : i32
    %21 = vector.broadcast %c16_i32_1 : i32 to vector<8x128xi32>
    %22 = arith.shrui %20, %21 : vector<8x128xi32>
    %23 = arith.xori %20, %22 : vector<8x128xi32>
    %c2146121005_i32_2 = arith.constant 2146121005 : i32
    %24 = vector.broadcast %c2146121005_i32_2 : i32 to vector<8x128xi32>
    %25 = arith.muli %23, %24 : vector<8x128xi32>
    %c15_i32_3 = arith.constant 15 : i32
    %26 = vector.broadcast %c15_i32_3 : i32 to vector<8x128xi32>
    %27 = arith.shrui %25, %26 : vector<8x128xi32>
    %28 = arith.xori %25, %27 : vector<8x128xi32>
    %c-2073352565_i32_4 = arith.constant -2073352565 : i32
    %29 = vector.broadcast %c-2073352565_i32_4 : i32 to vector<8x128xi32>
    %30 = arith.muli %28, %29 : vector<8x128xi32>
    %c16_i32_5 = arith.constant 16 : i32
    %31 = vector.broadcast %c16_i32_5 : i32 to vector<8x128xi32>
    %32 = arith.shrui %30, %31 : vector<8x128xi32>
    %33 = arith.xori %30, %32 : vector<8x128xi32>
    %c9_i32 = arith.constant 9 : i32
    %34 = vector.broadcast %c9_i32 : i32 to vector<8x128xi32>
    %35 = arith.shrui %33, %34 : vector<8x128xi32>
    %36 = arith.sitofp %35 : vector<8x128xi32> to vector<8x128xf32>
    %cst = arith.constant 1.1920929E-7 : f32
    %37 = vector.broadcast %cst : f32 to vector<8x128xf32>
    %38 = arith.mulf %36, %37 : vector<8x128xf32>
    %c0_6 = arith.constant 0 : index
    %c0_7 = arith.constant 0 : index
    %39 = vector.load %arg2[%c0_6, %c0_7] : memref<8x128xf32, #tpu.memory_space<vmem>>, vector<8x128xf32>
    tpu.vector_store %arg2[%c0_6, %c0_7], %38 {strides = array<i32>} : memref<8x128xf32, #tpu.memory_space<vmem>>, vector<8x128xf32>,
    return
  }
  func.func @transform_0(%arg0: i32) -> i32 {
    %c0_i32 = arith.constant 0 : i32
    %c0_i32_0 = arith.constant 0 : i32
    return %c0_i32 : i32
  }
  func.func @transform_1(%arg0: i32) -> (i32, i32) {
    %c0_i32 = arith.constant 0 : i32
    %c0_i32_0 = arith.constant 0 : i32
    return %arg0, %c0_i32 : i32, i32
  }
}

</mosaic_0001>

<llo_original>
// kernel: tpu_custom_call.1
$region0: #{tpu_custom_call.1}
  #allocation0 [shape = 'u32[]', space=smem, size = 0x4, offset = 0x4, fixed_abs, tag = 'smem constant byte address 0x4 - core index']
  #allocation1 [shape = 'u32[72,128]{1,0:T(1,128)}', space=vmem, size = 0x9000, scoped, tag = 'internal scratch']
  #allocation2 [shape = 's32[1]{0:T(128)S(6)}', space=smem, size = 0x200, scoped, tag = 'scoped memory for tpu_custom_call.1']
  %s0 = inlined_call_operand.<no memory space> [shape: s32[1], index: 0, kind: input, shape index: {}]
  %s1 = inlined_call_operand.hbm [shape: f32[8,128], index: 1, kind: output, shape index: {}]
  %s2 = sld [smem:[#allocation0]]
  $region14: #{tpu_custom_call.1} parent=0
    _
  %s4 = ssub.s32 1, %s2
  %s5 = scalar_select 0, %s4, %s2
  %6 = sst [smem:[#allocation2]] %s0
  $region1: #{tpu_custom_call.1} parent=0
    #allocation3 [shape = 'u8[4096]{0}', space=vmem, size = 0x1000, scoped, tag = 'output window, operand 0, single buffered']
    #allocation4 [shape = 's32[1]{0}', space=sflag, size = 0x4, scoped, tag = 'scoped memory for tpu_custom_call.1']
    %7 = vsyncpa [#allocation4], 0
    // Predicated region
    $region2: #{tpu_custom_call.1} parent=1 // pred_check
      _
    $region3: #{tpu_custom_call.1} parent=1 // pred_check_branch
      %9 = sbr.rel (0) target = $region5
    $region4: #{tpu_custom_call.1} parent=1 // pred_region
      _
    $region5: #{tpu_custom_call.1} parent=1 // pred_fallthru
      _
    %v10 = vlaneseq
    %v11 = vshrl.u32 %v10, 7
    %v12 = vlaneseq
    %v13 = vand.u32 %v12, 127
    %s14 = smul.u32 0, 8
    %v15 = vstv %s14
    %v16 = vadd.s32 %v15, %v11
    %v17 = vmul.u32 %v16, 128
    %v18 = vadd.s32 %v17, %v13
    %s19 = sld [smem:[#allocation2]]
    %s20 = smul.u32 %s19, 2654435769
    %s21 = sadd.s32 %s20, 1013904242
    %s22 = sshrl.u32 %s21, 16
    %s23 = sxor.u32 %s21, %s22
    %s24 = smul.u32 %s23, 2146121005
    %s25 = sshrl.u32 %s24, 15
    %s26 = sxor.u32 %s24, %s25
    %s27 = smul.u32 %s26, 2221614731
    %s28 = sshrl.u32 %s27, 16
    %s29 = sxor.u32 %s27, %s28
    %v30 = vstv %s29
    %v31 = vxor.u32 %v18, %v30
    %v32 = vshrl.u32 %v31, 16
    %v33 = vxor.u32 %v31, %v32
    %v34 = vmul.u32 %v33, 2146121005
    %v35 = vshrl.u32 %v34, 15
    %v36 = vxor.u32 %v34, %v35
    %v37 = vmul.u32 %v36, 2221614731
    %v38 = vshrl.u32 %v37, 16
    %v39 = vxor.u32 %v37, %v38
    %v40 = vshrl.u32 %v39, 9
    %v41 = vcvt.s32.f32 %v40
    %v42 = vmul.f32 %v41, 1.1920929e-07
    %43 = vst [vmem:[#allocation3] sm:$0xff] %v42
    // Predicated region
    $region6: #{tpu_custom_call.1} parent=1 // pred_check
      _
    $region7: #{tpu_custom_call.1} parent=1 // pred_check_branch
      %45 = sbr.rel (0) target = $region9
    $region8: #{tpu_custom_call.1} parent=1 // pred_region
      %47 = vsyncadd [#allocation4], 0
      %s49 = sshll.u32 [#allocation3], 4
      %s50 = int_to_ptr.vmem [resolvable:$true] %s49
      %s51 = sshll.u32 %s1, 4
      %s52 = int_to_ptr.hbm [resolvable:$true] %s51
      %54 = dma.vmem_to_hbm [thread:$0]  %s50, 128, %s52, [#allocation4]
    $region9: #{tpu_custom_call.1} parent=1 // pred_fallthru
      _
    // Predicated region
    $region10: #{tpu_custom_call.1} parent=1 // pred_check
      _
    $region11: #{tpu_custom_call.1} parent=1 // pred_check_branch
      %56 = sbr.rel (0) target = $region13
    $region12: #{tpu_custom_call.1} parent=1 // pred_region
      %58 = dma.done [#allocation4], 128
    $region13: #{tpu_custom_call.1} parent=1 // pred_fallthru
      _
    %59 = vsyncpa [#allocation4], 1

</llo_original>
